<compile_context>
chip_gen: v7x
topology: tpu7x:2x2x1
jax: 0.10.0
libtpu: 0.0.40
codegen_flags: <defaults>
</compile_context>

<pallas_src>
import functools
import math

import jax
import jax.numpy as jnp
from jax.experimental import pallas as pl
from jax.experimental.pallas import tpu as pltpu


def _round_up(x, m):
    return ((x + m - 1) // m) * m


def _vmem_capacity_bytes():
    try:
        return int(pltpu.get_tpu_info().vmem_capacity_bytes)
    except Exception:
        return 64 * 1024 * 1024  # conservative default (v7x per-core VMEM)


def _use_bf16_exp():
    # Packed-bf16 EUP exists on v6e and newer; v5e/v4 and older have no bf16
    # transcendental path, so keep the f32 exp there.
    try:
        kind = jax.devices()[0].device_kind.lower()
    except Exception:
        return False
    return not any(tag in kind for tag in ("v2", "v3", "v4", "v5"))


def _choose_tiling(n, d_pad, vmem_cap):
    """Pick (tile_q, n_pad); tile_q is a multiple of 16, sized for VMEM."""
    budget = int(0.70 * vmem_cap)

    def fits(t, n_p):
        slab = 2 * n_p * d_pad * 2          # bf16 slab (worst case 2 buffers)
        temps = 4 * t * n_p * 4             # ~4 live (tile_q, N) f32 temporaries
        return slab + temps <= budget

    n16 = _round_up(n, 16)
    if n16 <= 512 and fits(n16, n16):       # small problems: one tile
        return n16, n16
    for t in (512, 256, 128, 64, 32, 16):
        if t > n16:
            continue
        n_pad = _round_up(n, t)
        if fits(t, n_pad) or t == 16:
            return t, n_pad
    # TODO(synk): stream zk in column tiles (online logsumexp) when the bf16
    # slab itself exceeds the VMEM budget (very large N on v7x).
    return 16, _round_up(n, 16)


def _ntxent_lse_kernel(zn_ref, lse_ref, *, tile_q, n_real, use_bf16_exp):
    """One row-tile: per-row logsumexp_{j != k} sim[k, j], padded rows -> 0."""
    n_pad = zn_ref.shape[0]
    step = pl.program_id(0)
    q0 = pl.multiple_of(step * tile_q, tile_q)

    zk = zn_ref[...]                              # (n_pad, d_pad) bf16, resident
    zq = zn_ref[pl.ds(q0, tile_q), :]             # (tile_q, d_pad) bf16 view

    # Similarity tile (temperature already folded into the normalized slab).
    sim = jax.lax.dot_general(
        zq, zk, dimension_numbers=(((1,), (1,)), ((), ())),
        preferred_element_type=jnp.float32)       # (tile_q, n_pad) f32

    # Actual self-similarity of each query row (f32) for the diagonal
    # correction (replaces the O(N^2) iota/where mask).
    zq_f32 = zq.astype(jnp.float32)
    diag = jnp.sum(zq_f32 * zq_f32, axis=1, keepdims=True)    # (tile_q, 1)

    m = jnp.max(sim, axis=1, keepdims=True)                   # (tile_q, 1)

    if use_bf16_exp:
        expfn = lambda x: jnp.exp(x.astype(jnp.bfloat16)).astype(jnp.float32)
    else:
        expfn = jnp.exp

    sumexp = jnp.sum(expfn(sim - m), axis=1, keepdims=True)   # incl. self + pad
    sumexp = sumexp - expfn(diag - m)                         # drop self term
    n_pad_cols = n_pad - n_real
    if n_pad_cols > 0:
        # Zero-padded columns contribute sim == 0 exactly; remove analytically.
        sumexp = sumexp - jnp.float32(n_pad_cols) * expfn(-m)
    sumexp = jnp.maximum(sumexp, jnp.float32(1e-30))
    lse = jnp.log(sumexp) + m                                 # (tile_q, 1)

    if n_pad_cols > 0:
        rows = q0 + jax.lax.broadcasted_iota(jnp.int32, (tile_q, 1), 0)
        lse = jnp.where(rows < n_real, lse, 0.0)              # zero padded rows

    lse_ref[...] = lse


def ntxent_loss(z_i, z_j, temperature):
    assert z_i.shape == z_j.shape and z_i.ndim == 2
    b, d = z_i.shape
    n = 2 * b
    inv_sqrt_temp = 1.0 / math.sqrt(float(temperature))

    # O(N*D) preprocessing in plain XLA: F.normalize(dim=1) with the
    # temperature folded in, plus the (exact f32) positive-pair term. Keeping
    # this out of the kernel lets the grid axis be fully "parallel".
    z = jnp.concatenate([z_i, z_j], axis=0).astype(jnp.float32)
    ss = jnp.sum(z * z, axis=1, keepdims=True)
    zn = z * jax.lax.rsqrt(jnp.maximum(ss, 1e-24)) * inv_sqrt_temp
    pos_total = 2.0 * jnp.sum(zn[:b] * zn[b:])    # sum over rows of positive logit

    d_pad = _round_up(d, 128)
    vmem_cap = _vmem_capacity_bytes()
    tile_q, n_pad = _choose_tiling(n, d_pad, vmem_cap)
    nsteps = n_pad // tile_q

    zn_b = zn.astype(jnp.bfloat16)
    if n_pad != n or d_pad != d:
        zn_b = jnp.pad(zn_b, ((0, n_pad - n), (0, d_pad - d)))

    kernel = functools.partial(
        _ntxent_lse_kernel, tile_q=tile_q, n_real=n, use_bf16_exp=_use_bf16_exp())

    slab_bytes = n_pad * d_pad * 2
    temp_bytes = 4 * tile_q * n_pad * 4
    vmem_limit = int(min(0.85 * vmem_cap,
                         max(32 * 1024 * 1024, 2 * slab_bytes + 2 * temp_bytes)))

    def _call(single_buffer):
        if single_buffer:
            in_spec = pl.BlockSpec((n_pad, d_pad), lambda i: (0, 0),
                                   pipeline_mode=pl.Buffered(1))
        else:
            in_spec = pl.BlockSpec((n_pad, d_pad), lambda i: (0, 0))
        return pl.pallas_call(
            kernel,
            out_shape=jax.ShapeDtypeStruct((n_pad, 1), jnp.float32),
            grid_spec=pltpu.PrefetchScalarGridSpec(
                num_scalar_prefetch=0,
                grid=(nsteps,),
                in_specs=[in_spec],
                out_specs=pl.BlockSpec((tile_q, 1), lambda i: (i, 0)),
            ),
            compiler_params=pltpu.CompilerParams(
                dimension_semantics=("parallel",),
                vmem_limit_bytes=vmem_limit,
            ),
            cost_estimate=pl.CostEstimate(
                flops=2 * n_pad * n_pad * d_pad,
                transcendentals=n_pad * n_pad + 3 * n_pad,
                bytes_accessed=slab_bytes + n_pad * 4,
            ),
        )(zn_b)

    try:
        # Slab is read-only with a constant block index: one buffer is enough.
        lse_rows = _call(True)
    except Exception:
        lse_rows = _call(False)   # fall back to default double buffering

    return (jnp.sum(lse_rows) - pos_total) / n


def _ntxent_ref(z_i, z_j, temperature):
    # pure-JAX f32 reference for correctness checking
    b = z_i.shape[0]
    n = 2 * b
    z = jnp.concatenate([z_i, z_j], axis=0).astype(jnp.float32)
    z = z / jnp.maximum(jnp.linalg.norm(z, axis=1, keepdims=True), 1e-12)
    sim = (z @ z.T) / temperature
    idx = jnp.arange(n)
    pos = sim[idx, (idx + b) % n]
    sim_masked = jnp.where(jnp.eye(n, dtype=bool), -jnp.inf, sim)
    lse = jax.scipy.special.logsumexp(sim_masked, axis=1)
    return jnp.sum(lse - pos) / n


if __name__ == "__main__":
    key = jax.random.PRNGKey(0)
    k1, k2 = jax.random.split(key)
    B, D = 8, 32
    temperature = 0.5

    z_i = jax.random.normal(k1, (B, D), dtype=jnp.float32)
    z_j = jax.random.normal(k2, (B, D), dtype=jnp.float32)

    loss = ntxent_loss(z_i, z_j, temperature)
    loss = jax.block_until_ready(loss)

    ref = _ntxent_ref(z_i, z_j, temperature)
    # bf16 MXU operands (and bf16 exp on v6e+) => loosened tolerance vs f32 ref.
    assert jnp.allclose(loss, ref, rtol=2e-2, atol=2e-2), (loss, ref)

    print("KERNEL_OK")
</pallas_src>

<mosaic_0001>
module attributes {stable_mosaic.version = 11 : i64} {
  func.func @_ntxent_lse_kernel(%arg0: i32, %arg1: memref<16x128xbf16, #tpu.memory_space<vmem>>, %arg2: memref<16x1xf32, #tpu.memory_space<vmem>>) attributes {dimension_semantics = [#tpu.dimension_semantics<parallel>], iteration_bounds = array<i64: 1>, scalar_prefetch = 0 : i64, scratch_operands = 0 : i64, tpu.core_type = #tpu.core_type<tc>, window_params = [{pipeline_mode = #tpu.pipeline_mode<synchronous>, transform_indices = @transform_0, window_bounds = array<i64: 16, 128>}, {transform_indices = @transform_1, window_bounds = array<i64: 16, 1>}]} {
    %c16_i32 = arith.constant 16 : i32
    %0 = arith.muli %arg0, %c16_i32 : i32
    %1 = tpu.assume_multiple %0, 16 : i32
    %c0 = arith.constant 0 : index
    %c0_0 = arith.constant 0 : index
    %2 = vector.load %arg1[%c0, %c0_0] : memref<16x128xbf16, #tpu.memory_space<vmem>>, vector<16x128xbf16>
    %3 = arith.index_cast %1 : i32 to index
    %c0_1 = arith.constant 0 : index
    %4 = vector.load %arg1[%3, %c0_1] : memref<16x128xbf16, #tpu.memory_space<vmem>>, vector<16x128xbf16>
    %cst = arith.constant dense<0.000000e+00> : vector<16x16xf32>
    %5 = tpu.matmul %4, %2, %cst {dimension_numbers = #tpu.dot_dimension_numbers<[1], [1], [0], [0], [0, 0, 1, 0], [], []>} : vector<16x128xbf16>, vector<16x128xbf16>, vector<16x16xf32> -> vector<16x16xf32>
    %6 = arith.extf %4 : vector<16x128xbf16> to vector<16x128xf32>
    %7 = arith.mulf %6, %6 : vector<16x128xf32>
    %cst_2 = arith.constant dense<0.000000e+00> : vector<16xf32>
    %8 = vector.multi_reduction <add>, %7, %cst_2 [1] : vector<16x128xf32> to vector<16xf32>
    %9 = vector.shape_cast %8 : vector<16xf32> to vector<16x1xf32>
    %cst_3 = arith.constant dense<0xFF800000> : vector<16xf32>
    %10 = vector.multi_reduction <maximumf>, %5, %cst_3 [1] : vector<16x16xf32> to vector<16xf32>
    %11 = vector.shape_cast %10 : vector<16xf32> to vector<16x1xf32>
    %12 = vector.broadcast %11 : vector<16x1xf32> to vector<16x16xf32>
    %13 = arith.subf %5, %12 : vector<16x16xf32>
    %14 = arith.truncf %13 : vector<16x16xf32> to vector<16x16xbf16>
    %15 = math.exp %14 : vector<16x16xbf16>
    %16 = arith.extf %15 : vector<16x16xbf16> to vector<16x16xf32>
    %cst_4 = arith.constant dense<0.000000e+00> : vector<16xf32>
    %17 = vector.multi_reduction <add>, %16, %cst_4 [1] : vector<16x16xf32> to vector<16xf32>
    %18 = vector.shape_cast %17 : vector<16xf32> to vector<16x1xf32>
    %19 = arith.subf %9, %11 : vector<16x1xf32>
    %20 = arith.truncf %19 : vector<16x1xf32> to vector<16x1xbf16>
    %21 = math.exp %20 : vector<16x1xbf16>
    %22 = arith.extf %21 : vector<16x1xbf16> to vector<16x1xf32>
    %23 = arith.subf %18, %22 : vector<16x1xf32>
    %cst_5 = arith.constant 1.000000e-30 : f32
    %24 = vector.broadcast %cst_5 : f32 to vector<16x1xf32>
    %25 = arith.maximumf %23, %24 : vector<16x1xf32>
    %26 = math.log %25 : vector<16x1xf32>
    %27 = arith.addf %26, %11 : vector<16x1xf32>
    %c0_6 = arith.constant 0 : index
    %c0_7 = arith.constant 0 : index
    %28 = vector.load %arg2[%c0_6, %c0_7] : memref<16x1xf32, #tpu.memory_space<vmem>>, vector<16x1xf32>
    tpu.vector_store %arg2[%c0_6, %c0_7], %27 {strides = array<i32>} : memref<16x1xf32, #tpu.memory_space<vmem>>, vector<16x1xf32>,
    return
  }
  func.func @transform_0(%arg0: i32) -> (i32, i32) {
    %c0_i32 = arith.constant 0 : i32
    %c0_i32_0 = arith.constant 0 : i32
    %c0_i32_1 = arith.constant 0 : i32
    return %c0_i32, %c0_i32_0 : i32, i32
  }
  func.func @transform_1(%arg0: i32) -> (i32, i32) {
    %c0_i32 = arith.constant 0 : i32
    %c0_i32_0 = arith.constant 0 : i32
    return %arg0, %c0_i32 : i32, i32
  }
}

module attributes {stable_mosaic.version = 11 : i64} {
  func.func @_ntxent_lse_kernel(%arg0: i32, %arg1: memref<16x128xbf16, #tpu.memory_space<vmem>>, %arg2: memref<16x1xf32, #tpu.memory_space<vmem>>) attributes {dimension_semantics = [#tpu.dimension_semantics<parallel>], iteration_bounds = array<i64: 1>, scalar_prefetch = 0 : i64, scratch_operands = 0 : i64, tpu.core_type = #tpu.core_type<tc>, window_params = [{pipeline_mode = #tpu.pipeline_mode<synchronous>, transform_indices = @transform_0, window_bounds = array<i64: 16, 128>}, {transform_indices = @transform_1, window_bounds = array<i64: 16, 1>}]} {
    %c16_i32 = arith.constant 16 : i32
    %0 = arith.muli %arg0, %c16_i32 : i32
    %1 = tpu.assume_multiple %0, 16 : i32
    %c0 = arith.constant 0 : index
    %c0_0 = arith.constant 0 : index
    %2 = vector.load %arg1[%c0, %c0_0] : memref<16x128xbf16, #tpu.memory_space<vmem>>, vector<16x128xbf16>
    %3 = arith.index_cast %1 : i32 to index
    %c0_1 = arith.constant 0 : index
    %4 = vector.load %arg1[%3, %c0_1] : memref<16x128xbf16, #tpu.memory_space<vmem>>, vector<16x128xbf16>
    %cst = arith.constant dense<0.000000e+00> : vector<16x16xf32>
    %5 = tpu.matmul %4, %2, %cst {dimension_numbers = #tpu.dot_dimension_numbers<[1], [1], [0], [0], [0, 0, 1, 0], [], []>} : vector<16x128xbf16>, vector<16x128xbf16>, vector<16x16xf32> -> vector<16x16xf32>
    %6 = arith.extf %4 : vector<16x128xbf16> to vector<16x128xf32>
    %7 = arith.mulf %6, %6 : vector<16x128xf32>
    %cst_2 = arith.constant dense<0.000000e+00> : vector<16xf32>
    %8 = vector.multi_reduction <add>, %7, %cst_2 [1] : vector<16x128xf32> to vector<16xf32>
    %9 = vector.shape_cast %8 : vector<16xf32> to vector<16x1xf32>
    %cst_3 = arith.constant dense<0xFF800000> : vector<16xf32>
    %10 = vector.multi_reduction <maximumf>, %5, %cst_3 [1] : vector<16x16xf32> to vector<16xf32>
    %11 = vector.shape_cast %10 : vector<16xf32> to vector<16x1xf32>
    %12 = vector.broadcast %11 : vector<16x1xf32> to vector<16x16xf32>
    %13 = arith.subf %5, %12 : vector<16x16xf32>
    %14 = arith.truncf %13 : vector<16x16xf32> to vector<16x16xbf16>
    %15 = math.exp %14 : vector<16x16xbf16>
    %16 = arith.extf %15 : vector<16x16xbf16> to vector<16x16xf32>
    %cst_4 = arith.constant dense<0.000000e+00> : vector<16xf32>
    %17 = vector.multi_reduction <add>, %16, %cst_4 [1] : vector<16x16xf32> to vector<16xf32>
    %18 = vector.shape_cast %17 : vector<16xf32> to vector<16x1xf32>
    %19 = arith.subf %9, %11 : vector<16x1xf32>
    %20 = arith.truncf %19 : vector<16x1xf32> to vector<16x1xbf16>
    %21 = math.exp %20 : vector<16x1xbf16>
    %22 = arith.extf %21 : vector<16x1xbf16> to vector<16x1xf32>
    %23 = arith.subf %18, %22 : vector<16x1xf32>
    %cst_5 = arith.constant 1.000000e-30 : f32
    %24 = vector.broadcast %cst_5 : f32 to vector<16x1xf32>
    %25 = arith.maximumf %23, %24 : vector<16x1xf32>
    %26 = math.log %25 : vector<16x1xf32>
    %27 = arith.addf %26, %11 : vector<16x1xf32>
    %c0_6 = arith.constant 0 : index
    %c0_7 = arith.constant 0 : index
    %28 = vector.load %arg2[%c0_6, %c0_7] : memref<16x1xf32, #tpu.memory_space<vmem>>, vector<16x1xf32>
    tpu.vector_store %arg2[%c0_6, %c0_7], %27 {strides = array<i32>} : memref<16x1xf32, #tpu.memory_space<vmem>>, vector<16x1xf32>,
    return
  }
  func.func @transform_0(%arg0: i32) -> (i32, i32) {
    %c0_i32 = arith.constant 0 : i32
    %c0_i32_0 = arith.constant 0 : i32
    %c0_i32_1 = arith.constant 0 : i32
    return %c0_i32, %c0_i32_0 : i32, i32
  }
  func.func @transform_1(%arg0: i32) -> (i32, i32) {
    %c0_i32 = arith.constant 0 : i32
    %c0_i32_0 = arith.constant 0 : i32
    return %arg0, %c0_i32 : i32, i32
  }
}

</mosaic_0001>

<llo_original>
// kernel: tpu_custom_call.1
$region0: #{tpu_custom_call.1}
  #allocation0 [shape = 'u32[]', space=smem, size = 0x4, offset = 0x4, fixed_abs, tag = 'smem constant byte address 0x4 - core index']
  #allocation1 [shape = 'u32[144,128]{1,0:T(1,128)}', space=vmem, size = 0x12000, scoped, tag = 'internal scratch']
  %s0 = inlined_call_operand.hbm [shape: bf16[16,128], index: 0, kind: input, shape index: {}]
  %s1 = inlined_call_operand.vmem [shape: f32[16,1], index: 1, kind: output, shape index: {}]
  %s2 = sld [smem:[#allocation0]]
  $region18: #{tpu_custom_call.1} parent=0
    _
  %s4 = ssub.s32 1, %s2
  %s5 = scalar_select 0, %s4, %s2
  $region1: #{tpu_custom_call.1} parent=0
    #allocation2 [shape = 'u8[4096]{0}', space=vmem, size = 0x1000, scoped, tag = 'input window, operand 0, single buffered']
    #allocation3 [shape = 's32[1]{0}', space=sflag, size = 0x4, scoped, tag = 'scoped memory for tpu_custom_call.1']
    %6 = vsyncpa [#allocation3], 0
    // Predicated region
    $region2: #{tpu_custom_call.1} parent=1 // pred_check
      _
    $region3: #{tpu_custom_call.1} parent=1 // pred_check_branch
      %8 = sbr.rel (0) target = $region5
    $region4: #{tpu_custom_call.1} parent=1 // pred_region
      %s10 = ssub.s32 128, 128
      %11 = vsyncadd [#allocation3], %s10
      %s12 = sshll.u32 [#allocation2], 4
      %s13 = int_to_ptr.vmem [resolvable:$true] %s12
      %18 = dma.hbm_to_vmem [thread:$0]  %s0, 128, %s13, [#allocation3], 64, 64, 4
    $region5: #{tpu_custom_call.1} parent=1 // pred_fallthru
      _
    // Predicated region
    $region6: #{tpu_custom_call.1} parent=1 // pred_check
      _
    $region7: #{tpu_custom_call.1} parent=1 // pred_check_branch
      %20 = sbr.rel (0) target = $region9
    $region8: #{tpu_custom_call.1} parent=1 // pred_region
      %21 = dma.done [#allocation3], 128
    $region9: #{tpu_custom_call.1} parent=1 // pred_fallthru
      _
    %s23 = smul.u32 0, 16
    %v24 = vld [vmem:[#allocation2] sm:$0xf]
    %v25 = vld [vmem:[#allocation2 + $0x4] sm:$0xf]
    %s26 = sshra.s32 %s23, 3
    %s27 = sand.u32 %s23, 7
    %s28 = smul.addr %s26, 4
    %s29 = scalar_lea.vmem [#allocation2], %s28
    %v30 = vld [vmem:[%s29] sm:$0xf]
    %v31 = vld [vmem:[%s29 + $0x4] sm:$0xf]
    %v34 = vunpack.c.l.b16 %v30
    %v35 = vunpack.c.l.b16 %v31
    %v36 = vpack.c.b16 %v35, %v34
    %v40 = vunpack.c.l.b16 %v24
    %v41 = vunpack.c.l.b16 %v25
    %v42 = vpack.c.b16 %v41, %v40
    %44 = vmatprep.subr.bf16.mxu0 0
    %45 = vmatpush1.bf16.xpose.msra.mxu0 %v42
    %46 = vmatprep.subr.bf16.mxu0 0
    %47 = vmatpush1.bf16.xpose.msra.mxu0 0
    %48 = vmatprep.subr.bf16.mxu0 0
    %49 = vmatpush1.bf16.xpose.msra.mxu0 0
    %50 = vmatprep.subr.bf16.mxu0 0
    %51 = vmatpush1.bf16.xpose.msra.mxu0 0
    %52 = vmatprep.subr.bf16.mxu0 0
    %53 = vmatpush1.bf16.xpose.msra.mxu0 0
    %54 = vmatprep.subr.bf16.mxu0 0
    %55 = vmatpush1.bf16.xpose.msra.mxu0 0
    %56 = vmatprep.subr.bf16.mxu0 0
    %57 = vmatpush1.bf16.xpose.msra.mxu0 0
    %58 = vmatprep.subr.bf16.mxu0 0
    %59 = vmatpush1.bf16.xpose.msra.mxu0 0
    %60 = vmatprep.subr.bf16.mxu0 0
    %61 = vmatpush1.bf16.xpose.msra.mxu0 0
    %62 = vmatprep.subr.bf16.mxu0 0
    %63 = vmatpush1.bf16.xpose.msra.mxu0 0
    %64 = vmatprep.subr.bf16.mxu0 0
    %65 = vmatpush1.bf16.xpose.msra.mxu0 0
    %66 = vmatprep.subr.bf16.mxu0 0
    %67 = vmatpush1.bf16.xpose.msra.mxu0 0
    %68 = vmatprep.subr.bf16.mxu0 0
    %69 = vmatpush1.bf16.xpose.msra.mxu0 0
    %70 = vmatprep.subr.bf16.mxu0 0
    %71 = vmatpush1.bf16.xpose.msra.mxu0 0
    %72 = vmatprep.subr.bf16.mxu0 0
    %73 = vmatpush1.bf16.xpose.msra.mxu0 0
    %74 = vmatprep.subr.bf16.mxu0 0
    %75 = vmatpush1.bf16.xpose.msra.mxu0 0
    %76 = vmatprep.mubr.bf16.mxu0 0
    %77 = vmatmul.mubr.bf16.gmra.mrb[0].mxu0 %v36
    %v78 = vpop.f32.mrb[0].mxu0
    %v79 = vadd.f32 0.0, %v78
    %v80 = vpop.f32.mrb[0].mxu0
    %v81 = vpop.f32.mrb[0].mxu0
    %v82 = vadd.f32 0.0, %v81
    %v83 = vpop.f32.mrb[0].mxu0
    %84 = vdwg.mxu0
    %v85 = vunpack.c.l.bf16 %v30
    %v86 = vunpack.c.l.bf16 %v31
    %v87 = vmul.f32 %v85, %v85
    %v88 = vmul.f32 %v86, %v86
    %89 = vadd.xlane.f32.xlu0 %v87
    %v90 = vpop.xlane.xlu0 %89
    %91 = vadd.xlane.f32.xlu0 %v88
    %v92 = vpop.xlane.xlu0 %91
    %vm93 = vcmask 130048
    %v94 = vsel %vm93, %v79, -inf
    %95 = vmax.xlane.f32.xlu0 %v94
    %v96 = vpop.xlane.xlu0 %95
    %v97 = vsel %vm93, %v82, -inf
    %98 = vmax.xlane.f32.xlu0 %v97
    %v99 = vpop.xlane.xlu0 %98
    %v100 = vsub.f32 %v79, %v96
    %v101 = vsub.f32 %v82, %v99
    %v102 = vpack.c.bf16 %v101, %v100
    %v104 = vmul.bf16 %v102, 1069105081
    %v105 = vpow.bf16.pop %v104
    %v106 = vunpack.c.l.bf16 %v105
    %v107 = vunpack.c.h.bf16 %v105
    %v108 = vsel %vm93, %v106, 0.0
    %109 = vadd.xlane.f32.xlu0 %v108
    %v110 = vpop.xlane.xlu0 %109
    %v111 = vsel %vm93, %v107, 0.0
    %112 = vadd.xlane.f32.xlu0 %v111
    %v113 = vpop.xlane.xlu0 %112
    %v114 = vsub.f32 %v90, %v96
    %v115 = vsub.f32 %v92, %v99
    %v116 = vpack.c.bf16 %v115, %v114
    %v118 = vmul.bf16 %v116, 1069105081
    %v119 = vpow.bf16.pop %v118
    %v120 = vunpack.c.l.bf16 %v119
    %v121 = vunpack.c.h.bf16 %v119
    %v122 = vsub.f32 %v110, %v120
    %v123 = vsub.f32 %v113, %v121
    %v124 = vmax.f32 %v122, 1e-30
    %v125 = vmax.f32 %v123, 1e-30
    %v126 = vlog2.pop %v124
    %v127 = vmul.f32 %v126, 0.6931472
    %v128 = vlog2.pop %v125
    %v129 = vmul.f32 %v128, 0.6931472
    %v130 = vadd.f32 %v127, %v96
    %v131 = vadd.f32 %v129, %v99
    %vm132 = vcmask 7168
    %133 = vst.msk [vmem:[%s1] sm:$0xff] %vm132, %v130
    %134 = vst.msk [vmem:[%s1 + $0x8] sm:$0xff] %vm132, %v131
    // Predicated region
    $region10: #{tpu_custom_call.1} parent=1 // pred_check
      _
    $region11: #{tpu_custom_call.1} parent=1 // pred_check_branch
      %136 = sbr.rel (0) target = $region13
    $region12: #{tpu_custom_call.1} parent=1 // pred_region
      _
    $region13: #{tpu_custom_call.1} parent=1 // pred_fallthru
      _
    // Predicated region
    $region14: #{tpu_custom_call.1} parent=1 // pred_check
      _
    $region15: #{tpu_custom_call.1} parent=1 // pred_check_branch
      %138 = sbr.rel (0) target = $region17
    $region16: #{tpu_custom_call.1} parent=1 // pred_region
      _
    $region17: #{tpu_custom_call.1} parent=1 // pred_fallthru
      _
    %139 = vsyncpa [#allocation3], 1

// kernel: tpu_custom_call.1
$region0: #{tpu_custom_call.1}
  #allocation0 [shape = 'u32[]', space=smem, size = 0x4, offset = 0x4, fixed_abs, tag = 'smem constant byte address 0x4 - core index']
  #allocation1 [shape = 'u32[144,128]{1,0:T(1,128)}', space=vmem, size = 0x12000, scoped, tag = 'internal scratch']
  %s0 = inlined_call_operand.hbm [shape: bf16[16,128], index: 0, kind: input, shape index: {}]
  %s1 = inlined_call_operand.vmem [shape: f32[16,1], index: 1, kind: output, shape index: {}]
  %s2 = sld [smem:[#allocation0]]
  $region18: #{tpu_custom_call.1} parent=0
    _
  %s4 = ssub.s32 1, %s2
  %s5 = scalar_select 0, %s4, %s2
  $region1: #{tpu_custom_call.1} parent=0
    #allocation2 [shape = 'u8[4096]{0}', space=vmem, size = 0x1000, scoped, tag = 'input window, operand 0, single buffered']
    #allocation3 [shape = 's32[1]{0}', space=sflag, size = 0x4, scoped, tag = 'scoped memory for tpu_custom_call.1']
    %6 = vsyncpa [#allocation3], 0
    // Predicated region
    $region2: #{tpu_custom_call.1} parent=1 // pred_check
      _
    $region3: #{tpu_custom_call.1} parent=1 // pred_check_branch
      %8 = sbr.rel (0) target = $region5
    $region4: #{tpu_custom_call.1} parent=1 // pred_region
      %s10 = ssub.s32 128, 128
      %11 = vsyncadd [#allocation3], %s10
      %s12 = sshll.u32 [#allocation2], 4
      %s13 = int_to_ptr.vmem [resolvable:$true] %s12
      %18 = dma.hbm_to_vmem [thread:$0]  %s0, 128, %s13, [#allocation3], 64, 64, 4
    $region5: #{tpu_custom_call.1} parent=1 // pred_fallthru
      _
    // Predicated region
    $region6: #{tpu_custom_call.1} parent=1 // pred_check
      _
    $region7: #{tpu_custom_call.1} parent=1 // pred_check_branch
      %20 = sbr.rel (0) target = $region9
    $region8: #{tpu_custom_call.1} parent=1 // pred_region
      %21 = dma.done [#allocation3], 128
    $region9: #{tpu_custom_call.1} parent=1 // pred_fallthru
      _
    %s23 = smul.u32 0, 16
    %v24 = vld [vmem:[#allocation2] sm:$0xf]
    %v25 = vld [vmem:[#allocation2 + $0x4] sm:$0xf]
    %s26 = sshra.s32 %s23, 3
    %s27 = sand.u32 %s23, 7
    %s28 = smul.addr %s26, 4
    %s29 = scalar_lea.vmem [#allocation2], %s28
    %v30 = vld [vmem:[%s29] sm:$0xf]
    %v31 = vld [vmem:[%s29 + $0x4] sm:$0xf]
    %v34 = vunpack.c.l.b16 %v30
    %v35 = vunpack.c.l.b16 %v31
    %v36 = vpack.c.b16 %v35, %v34
    %v40 = vunpack.c.l.b16 %v24
    %v41 = vunpack.c.l.b16 %v25
    %v42 = vpack.c.b16 %v41, %v40
    %44 = vmatprep.subr.bf16.mxu0 0
    %45 = vmatpush1.bf16.xpose.msra.mxu0 %v42
    %46 = vmatprep.subr.bf16.mxu0 0
    %47 = vmatpush1.bf16.xpose.msra.mxu0 0
    %48 = vmatprep.subr.bf16.mxu0 0
    %49 = vmatpush1.bf16.xpose.msra.mxu0 0
    %50 = vmatprep.subr.bf16.mxu0 0
    %51 = vmatpush1.bf16.xpose.msra.mxu0 0
    %52 = vmatprep.subr.bf16.mxu0 0
    %53 = vmatpush1.bf16.xpose.msra.mxu0 0
    %54 = vmatprep.subr.bf16.mxu0 0
    %55 = vmatpush1.bf16.xpose.msra.mxu0 0
    %56 = vmatprep.subr.bf16.mxu0 0
    %57 = vmatpush1.bf16.xpose.msra.mxu0 0
    %58 = vmatprep.subr.bf16.mxu0 0
    %59 = vmatpush1.bf16.xpose.msra.mxu0 0
    %60 = vmatprep.subr.bf16.mxu0 0
    %61 = vmatpush1.bf16.xpose.msra.mxu0 0
    %62 = vmatprep.subr.bf16.mxu0 0
    %63 = vmatpush1.bf16.xpose.msra.mxu0 0
    %64 = vmatprep.subr.bf16.mxu0 0
    %65 = vmatpush1.bf16.xpose.msra.mxu0 0
    %66 = vmatprep.subr.bf16.mxu0 0
    %67 = vmatpush1.bf16.xpose.msra.mxu0 0
    %68 = vmatprep.subr.bf16.mxu0 0
    %69 = vmatpush1.bf16.xpose.msra.mxu0 0
    %70 = vmatprep.subr.bf16.mxu0 0
    %71 = vmatpush1.bf16.xpose.msra.mxu0 0
    %72 = vmatprep.subr.bf16.mxu0 0
    %73 = vmatpush1.bf16.xpose.msra.mxu0 0
    %74 = vmatprep.subr.bf16.mxu0 0
    %75 = vmatpush1.bf16.xpose.msra.mxu0 0
    %76 = vmatprep.mubr.bf16.mxu0 0
    %77 = vmatmul.mubr.bf16.gmra.mrb[0].mxu0 %v36
    %v78 = vpop.f32.mrb[0].mxu0
    %v79 = vadd.f32 0.0, %v78
    %v80 = vpop.f32.mrb[0].mxu0
    %v81 = vpop.f32.mrb[0].mxu0
    %v82 = vadd.f32 0.0, %v81
    %v83 = vpop.f32.mrb[0].mxu0
    %84 = vdwg.mxu0
    %v85 = vunpack.c.l.bf16 %v30
    %v86 = vunpack.c.l.bf16 %v31
    %v87 = vmul.f32 %v85, %v85
    %v88 = vmul.f32 %v86, %v86
    %89 = vadd.xlane.f32.xlu0 %v87
    %v90 = vpop.xlane.xlu0 %89
    %91 = vadd.xlane.f32.xlu0 %v88
    %v92 = vpop.xlane.xlu0 %91
    %vm93 = vcmask 130048
    %v94 = vsel %vm93, %v79, -inf
    %95 = vmax.xlane.f32.xlu0 %v94
    %v96 = vpop.xlane.xlu0 %95
    %v97 = vsel %vm93, %v82, -inf
    %98 = vmax.xlane.f32.xlu0 %v97
    %v99 = vpop.xlane.xlu0 %98
    %v100 = vsub.f32 %v79, %v96
    %v101 = vsub.f32 %v82, %v99
    %v102 = vpack.c.bf16 %v101, %v100
    %v104 = vmul.bf16 %v102, 1069105081
    %v105 = vpow.bf16.pop %v104
    %v106 = vunpack.c.l.bf16 %v105
    %v107 = vunpack.c.h.bf16 %v105
    %v108 = vsel %vm93, %v106, 0.0
    %109 = vadd.xlane.f32.xlu0 %v108
    %v110 = vpop.xlane.xlu0 %109
    %v111 = vsel %vm93, %v107, 0.0
    %112 = vadd.xlane.f32.xlu0 %v111
    %v113 = vpop.xlane.xlu0 %112
    %v114 = vsub.f32 %v90, %v96
    %v115 = vsub.f32 %v92, %v99
    %v116 = vpack.c.bf16 %v115, %v114
    %v118 = vmul.bf16 %v116, 1069105081
    %v119 = vpow.bf16.pop %v118
    %v120 = vunpack.c.l.bf16 %v119
    %v121 = vunpack.c.h.bf16 %v119
    %v122 = vsub.f32 %v110, %v120
    %v123 = vsub.f32 %v113, %v121
    %v124 = vmax.f32 %v122, 1e-30
    %v125 = vmax.f32 %v123, 1e-30
    %v126 = vlog2.pop %v124
    %v127 = vmul.f32 %v126, 0.6931472
    %v128 = vlog2.pop %v125
    %v129 = vmul.f32 %v128, 0.6931472
    %v130 = vadd.f32 %v127, %v96
    %v131 = vadd.f32 %v129, %v99
    %vm132 = vcmask 7168
    %133 = vst.msk [vmem:[%s1] sm:$0xff] %vm132, %v130
    %134 = vst.msk [vmem:[%s1 + $0x8] sm:$0xff] %vm132, %v131
    // Predicated region
    $region10: #{tpu_custom_call.1} parent=1 // pred_check
      _
    $region11: #{tpu_custom_call.1} parent=1 // pred_check_branch
      %136 = sbr.rel (0) target = $region13
    $region12: #{tpu_custom_call.1} parent=1 // pred_region
      _
    $region13: #{tpu_custom_call.1} parent=1 // pred_fallthru
      _
    // Predicated region
    $region14: #{tpu_custom_call.1} parent=1 // pred_check
      _
    $region15: #{tpu_custom_call.1} parent=1 // pred_check_branch
      %138 = sbr.rel (0) target = $region17
    $region16: #{tpu_custom_call.1} parent=1 // pred_region
      _
    $region17: #{tpu_custom_call.1} parent=1 // pred_fallthru
      _
    %139 = vsyncpa [#allocation3], 1

</llo_original>
